<compile_context>
chip_gen: v6e
topology: v6e:2x2x1
jax: 0.10.0
libtpu: 0.0.40
codegen_flags: <defaults>
</compile_context>

<pallas_src>
import functools
import math

import jax
import jax.numpy as jnp
from jax.experimental import pallas as pl
from jax.experimental.pallas import tpu as pltpu

GAMMA = 2.0
ALPHA = 0.25
_MAX_FOLD_LANES = 16384   # use the lcm(C,128) fold while rows stay this wide


def _cdiv(a, b):
    return -(-a // b)


def _round_up(a, b):
    return _cdiv(a, b) * b


def _chip_defaults():
    """(n_outer, block_bytes): outer TensorCore split and logits bytes per block."""
    try:
        kind = jax.devices()[0].device_kind.lower()
    except Exception:
        return 1, 1 << 20
    if "v5 lite" in kind or "v5e" in kind:
        return 1, 1 << 20          # v5e: 1 TC, HBM-bound -> ~1 MiB blocks
    if "v6" in kind:
        return 1, 2 << 20          # v6e: 1 TC, bigger blocks are free VMEM-wise
    if "v2" in kind or "v3" in kind:
        return 1, 1 << 20          # one TC per visible device
    return 2, 2 << 20              # v7x / v4 / v5p: 2 TensorCores per device


def _focal_kernel(x_ref, t_ref, e_ref, cls_ref, out_ref, acc_ref, *,
                  gamma, alpha, expand_with_dot, mask_pad_cols):
    i = pl.program_id(1)                       # inner (reduction) grid axis

    @pl.when(i == 0)
    def _():
        acc_ref[...] = jnp.zeros_like(acc_ref)

    x = x_ref[...]                             # (TR, W) f32 logits, lane-dense
    cls = cls_ref[...]                         # (1, W) f32 1-based ids; 0 = pad col

    # Per-lane target ids: expand the compact (TR, K) per-sample targets across
    # their C lanes with a 0/1 matmul on the otherwise-idle MXU.
    if expand_with_dot:
        t = jnp.dot(t_ref[...], e_ref[...], preferred_element_type=jnp.float32)
    else:
        t = t_ref[...]                         # (TR, 1): lane-broadcasts below

    # Stable log-sigmoid: 2 transcendentals (exp, log1p).
    e = jnp.exp(-jnp.abs(x))
    log_p = jnp.minimum(x, 0.0) - jnp.log1p(e)   # log(sigmoid(x))
    log_1mp = log_p - x                          # log(1 - sigmoid(x))
    # sigmoid(x) from e via approx reciprocal (EUP vrcp) + one Newton step (VPU).
    d = 1.0 + e
    r = pl.reciprocal(d, approx=True)
    r = r * (2.0 - d * r)
    p = jnp.where(x >= 0.0, 1.0, e) * r
    q = 1.0 - p

    if float(gamma) == 2.0:
        mod_pos = q * q                          # (1-p)^2 without pow
        mod_neg = p * p
    elif float(gamma).is_integer() and gamma >= 0:
        mod_pos = jnp.ones_like(q)
        mod_neg = jnp.ones_like(p)
        for _ in range(int(gamma)):
            mod_pos = mod_pos * q
            mod_neg = mod_neg * p
    else:
        mod_pos = q ** gamma
        mod_neg = p ** gamma

    pos = t == cls
    neg = jnp.logical_and(t != cls, t >= 0.0)
    if mask_pad_cols:                            # padded class columns: cls == 0
        valid = cls >= 1.0
        pos = jnp.logical_and(pos, valid)
        neg = jnp.logical_and(neg, valid)

    loss = (jnp.where(pos, (-alpha) * (mod_pos * log_p), 0.0)
            + jnp.where(neg, (alpha - 1.0) * (mod_neg * log_1mp), 0.0))

    # Fold the (TR, W) tile to one (8, W) slab (tile-aligned, pure VPU adds) and
    # accumulate; the cross-lane/sublane reduce runs only on the last step.
    tr, w = loss.shape
    if tr == 8:
        acc_ref[...] += loss
    else:
        acc_ref[...] += loss.reshape(tr // 8, 8, w).sum(axis=0)

    @pl.when(i == pl.num_programs(1) - 1)
    def _():
        out_ref[...] = jnp.broadcast_to(jnp.sum(acc_ref[...]), (1, 128))


def sigmoid_focal_loss(out, target, gamma=GAMMA, alpha=ALPHA, *,
                       n_outer=None, block_bytes=None):
    """out: (N, C) float logits; target: (N,) int ids in [0, C] (0 = background).
    Returns the scalar focal-loss sum (matches the PyTorch module)."""
    out = out.astype(jnp.float32)
    target = target.astype(jnp.int32)
    n, c = out.shape

    chip_outer, chip_block = _chip_defaults()
    n_outer = chip_outer if n_outer is None else n_outer
    block_bytes = chip_block if block_bytes is None else block_bytes

    # Lane-dense fold of the class axis: W = lcm(C, 128), K samples per row.
    # For very large lcm fall back to padding C to a multiple of 128 (masked).
    lane_fold = (c * 128) // math.gcd(c, 128)
    if lane_fold <= _MAX_FOLD_LANES:
        lane_w, k, c_pad = lane_fold, lane_fold // c, c
    else:
        c_pad = _round_up(c, 128)
        lane_w, k = c_pad, 1
    mask_pad_cols = c_pad != c

    fr = _cdiv(n, k)                              # folded rows of real data

    # Row tiling + (gated) outer split across TensorCores.
    tr_cap = max(8, (block_bytes // (lane_w * 4)) // 8 * 8)
    tr = min(tr_cap, _round_up(max(_cdiv(fr, max(n_outer, 1)), 1), 8))
    g = n_outer if (n_outer > 1 and fr >= n_outer * tr) else 1
    if g == 1:
        tr = min(tr_cap, _round_up(max(fr, 1), 8))
    fr_pad = _round_up(fr, g * tr)
    inner = fr_pad // (g * tr)
    n_pad = fr_pad * k

    # Host-side prep.  Padded samples carry target = -1 => contribute exactly 0.
    # The pad + fold fuse into a single relayout copy under jit.
    # TODO(synk): emit logits pre-folded as (rows, lane_w) upstream to drop it.
    if mask_pad_cols:
        x_fold = jnp.pad(out, ((0, n_pad - n), (0, c_pad - c)))
    else:
        x_pad = jnp.pad(out, ((0, n_pad - n), (0, 0))) if n_pad != n else out
        x_fold = x_pad.reshape(fr_pad, lane_w)
    t_pad = (jnp.pad(target, (0, n_pad - n), constant_values=-1)
             if n_pad != n else target)
    t_fold = t_pad.reshape(fr_pad, k).astype(jnp.float32)

    # Pad K up to >= 8 for a friendlier MXU shape; the extra columns only hit
    # all-zero rows of the expansion matrix, so they contribute nothing.
    k_mm = k if k == 1 else max(k, 8)
    if k_mm != k:
        t_fold = jnp.pad(t_fold, ((0, 0), (0, k_mm - k)))

    lane = jnp.arange(lane_w, dtype=jnp.int32)
    m = lane % c_pad
    cls_row = jnp.where(m < c, m + 1, 0).astype(jnp.float32).reshape(1, lane_w)
    expand = (lane[None, :] // c_pad ==
              jnp.arange(k_mm, dtype=jnp.int32)[:, None]).astype(jnp.float32)

    # Explicit VMEM budget: double-buffered inputs (the (tr, K) target block is
    # lane-padded to 128 in VMEM) + constants + the (8, W) accumulator + slack.
    x_blk = tr * lane_w * 4
    t_blk = tr * 128 * 4
    const_blk = (_round_up(k_mm, 8) + 8) * lane_w * 4
    vmem_limit = int(min(2 * (x_blk + t_blk + const_blk)
                         + 8 * lane_w * 4 + (4 << 20), 60 << 20))

    kernel = functools.partial(
        _focal_kernel, gamma=float(gamma), alpha=float(alpha),
        expand_with_dot=(k > 1), mask_pad_cols=mask_pad_cols)
    row_map = lambda go, i: (go * inner + i, 0)

    partials = pl.pallas_call(
        kernel,
        out_shape=jax.ShapeDtypeStruct((1, 128 * g), jnp.float32),
        grid_spec=pltpu.PrefetchScalarGridSpec(
            num_scalar_prefetch=0,
            grid=(g, inner),
            in_specs=[
                pl.BlockSpec((tr, lane_w), row_map),
                pl.BlockSpec((tr, k_mm), row_map),
                pl.BlockSpec((k_mm, lane_w), lambda go, i: (0, 0)),
                pl.BlockSpec((1, lane_w), lambda go, i: (0, 0)),
            ],
            out_specs=pl.BlockSpec((1, 128), lambda go, i: (0, go)),
            scratch_shapes=[pltpu.VMEM((8, lane_w), jnp.float32)],
        ),
        compiler_params=pltpu.CompilerParams(
            dimension_semantics=("parallel", "arbitrary"),
            vmem_limit_bytes=vmem_limit,
        ),
    )(x_fold, t_fold, expand, cls_row)

    # One lane-broadcast partial sum per outer core; combine in the wrapper.
    return jnp.sum(partials.reshape(g, 128)[:, 0])


def _reference(out, target, gamma=GAMMA, alpha=ALPHA):
    """Naive JAX port of the PyTorch module (for validation)."""
    c = out.shape[1]
    class_ids = jnp.arange(1, c + 1, dtype=jnp.int32)[None, :]
    t = target.astype(jnp.int32)[:, None]
    p = jax.nn.sigmoid(out.astype(jnp.float32))
    term1 = (1 - p) ** gamma * jnp.log(p)
    term2 = p ** gamma * jnp.log(1 - p)
    loss = (-(t == class_ids).astype(jnp.float32) * alpha * term1
            - ((t != class_ids) & (t >= 0)).astype(jnp.float32) * (1 - alpha) * term2)
    return loss.sum()


if __name__ == "__main__":
    key = jax.random.PRNGKey(0)
    k1, k2 = jax.random.split(key)

    N, C = 500, 8    # exercises row padding, the MXU expansion and the fold
    out = jax.random.normal(k1, (N, C), dtype=jnp.float32)
    # targets in [0, C]: 0 = no positive class, 1..C = 1-based positive class.
    target = jax.random.randint(k2, (N,), 0, C + 1, dtype=jnp.int32)

    loss = jax.block_until_ready(jax.jit(sigmoid_focal_loss)(out, target))
    ref = jax.block_until_ready(_reference(out, target))

    assert jnp.allclose(loss, ref, rtol=1e-3, atol=1e-3), (loss, ref)
    print("KERNEL_OK")
</pallas_src>

<mosaic_0001>
module attributes {stable_mosaic.version = 11 : i64} {
  func.func @_focal_kernel(%arg0: i32, %arg1: i32, %arg2: memref<16x128xf32, #tpu.memory_space<vmem>>, %arg3: memref<16x16xf32, #tpu.memory_space<vmem>>, %arg4: memref<16x128xf32, #tpu.memory_space<vmem>>, %arg5: memref<1x128xf32, #tpu.memory_space<vmem>>, %arg6: memref<1x128xf32, #tpu.memory_space<vmem>>, %arg7: memref<8x128xf32, #tpu.memory_space<vmem>>) attributes {dimension_semantics = [#tpu.dimension_semantics<parallel>, #tpu.dimension_semantics<arbitrary>], iteration_bounds = array<i64: 2, 1>, scalar_prefetch = 0 : i64, scratch_operands = 1 : i64, tpu.core_type = #tpu.core_type<tc>, window_params = [{transform_indices = @transform_0, window_bounds = array<i64: 16, 128>}, {transform_indices = @transform_1, window_bounds = array<i64: 16, 16>}, {pipeline_mode = #tpu.pipeline_mode<synchronous>, transform_indices = @transform_2, window_bounds = array<i64: 16, 128>}, {pipeline_mode = #tpu.pipeline_mode<synchronous>, transform_indices = @transform_3, window_bounds = array<i64: 1, 128>}, {transform_indices = @transform_4, window_bounds = array<i64: 1, 128>}]} {
    %c0_i32 = arith.constant 0 : i32
    %0 = arith.cmpi eq, %arg1, %c0_i32 : i32
    %1 = arith.extui %0 : i1 to i32
    %c0_i32_0 = arith.constant 0 : i32
    %2 = arith.cmpi ne, %1, %c0_i32_0 : i32
    scf.if %2 {
      %cst_27 = arith.constant 0.000000e+00 : f32
      %59 = vector.broadcast %cst_27 : f32 to vector<8x128xf32>
      %c0_28 = arith.constant 0 : index
      %c0_29 = arith.constant 0 : index
      %60 = vector.load %arg7[%c0_28, %c0_29] : memref<8x128xf32, #tpu.memory_space<vmem>>, vector<8x128xf32>
      tpu.vector_store %arg7[%c0_28, %c0_29], %59 {strides = array<i32>} : memref<8x128xf32, #tpu.memory_space<vmem>>, vector<8x128xf32>,
    } else {
    }
    %c0 = arith.constant 0 : index
    %c0_1 = arith.constant 0 : index
    %3 = vector.load %arg2[%c0, %c0_1] : memref<16x128xf32, #tpu.memory_space<vmem>>, vector<16x128xf32>
    %c0_2 = arith.constant 0 : index
    %c0_3 = arith.constant 0 : index
    %4 = vector.load %arg5[%c0_2, %c0_3] : memref<1x128xf32, #tpu.memory_space<vmem>>, vector<1x128xf32>
    %c0_4 = arith.constant 0 : index
    %c0_5 = arith.constant 0 : index
    %5 = vector.load %arg3[%c0_4, %c0_5] : memref<16x16xf32, #tpu.memory_space<vmem>>, vector<16x16xf32>
    %c0_6 = arith.constant 0 : index
    %c0_7 = arith.constant 0 : index
    %6 = vector.load %arg4[%c0_6, %c0_7] : memref<16x128xf32, #tpu.memory_space<vmem>>, vector<16x128xf32>
    %cst = arith.constant dense<0.000000e+00> : vector<16x128xf32>
    %7 = tpu.matmul %5, %6, %cst {dimension_numbers = #tpu.dot_dimension_numbers<[1], [0], [0], [1], [0, 0, 1, 1], [], []>} : vector<16x16xf32>, vector<16x128xf32>, vector<16x128xf32> -> vector<16x128xf32>
    %8 = math.absf %3 : vector<16x128xf32>
    %cst_8 = arith.constant 0.000000e+00 : f32
    %9 = vector.broadcast %cst_8 : f32 to vector<16x128xf32>
    %10 = arith.subf %9, %8 : vector<16x128xf32>
    %11 = math.exp %10 : vector<16x128xf32>
    %cst_9 = arith.constant 0.000000e+00 : f32
    %12 = vector.broadcast %cst_9 : f32 to vector<16x128xf32>
    %13 = arith.minimumf %3, %12 : vector<16x128xf32>
    %14 = math.log1p %11 : vector<16x128xf32>
    %15 = arith.subf %13, %14 : vector<16x128xf32>
    %16 = arith.subf %15, %3 : vector<16x128xf32>
    %cst_10 = arith.constant 1.000000e+00 : f32
    %17 = vector.broadcast %cst_10 : f32 to vector<16x128xf32>
    %18 = arith.addf %17, %11 : vector<16x128xf32>
    %19 = tpu.reciprocal %18 {approx = true} : vector<16x128xf32> -> vector<16x128xf32>
    %20 = arith.mulf %18, %19 : vector<16x128xf32>
    %cst_11 = arith.constant 2.000000e+00 : f32
    %21 = vector.broadcast %cst_11 : f32 to vector<16x128xf32>
    %22 = arith.subf %21, %20 : vector<16x128xf32>
    %23 = arith.mulf %19, %22 : vector<16x128xf32>
    %cst_12 = arith.constant 0.000000e+00 : f32
    %24 = vector.broadcast %cst_12 : f32 to vector<16x128xf32>
    %25 = arith.cmpf oge, %3, %24 : vector<16x128xf32>
    %cst_13 = arith.constant 1.000000e+00 : f32
    %26 = vector.broadcast %cst_13 : f32 to vector<16x128xf32>
    %27 = arith.select %25, %26, %11 : vector<16x128xi1>, vector<16x128xf32>
    %28 = arith.mulf %27, %23 : vector<16x128xf32>
    %cst_14 = arith.constant 1.000000e+00 : f32
    %29 = vector.broadcast %cst_14 : f32 to vector<16x128xf32>
    %30 = arith.subf %29, %28 : vector<16x128xf32>
    %31 = arith.mulf %30, %30 : vector<16x128xf32>
    %32 = arith.mulf %28, %28 : vector<16x128xf32>
    %33 = vector.broadcast %4 : vector<1x128xf32> to vector<16x128xf32>
    %34 = arith.cmpf oeq, %7, %33 : vector<16x128xf32>
    %35 = vector.broadcast %4 : vector<1x128xf32> to vector<16x128xf32>
    %36 = arith.cmpf one, %7, %35 : vector<16x128xf32>
    %cst_15 = arith.constant 0.000000e+00 : f32
    %37 = vector.broadcast %cst_15 : f32 to vector<16x128xf32>
    %38 = arith.cmpf oge, %7, %37 : vector<16x128xf32>
    %39 = arith.andi %36, %38 : vector<16x128xi1>
    %40 = arith.mulf %31, %15 : vector<16x128xf32>
    %cst_16 = arith.constant -2.500000e-01 : f32
    %41 = vector.broadcast %cst_16 : f32 to vector<16x128xf32>
    %42 = arith.mulf %41, %40 : vector<16x128xf32>
    %cst_17 = arith.constant 0.000000e+00 : f32
    %43 = vector.broadcast %cst_17 : f32 to vector<16x128xf32>
    %44 = arith.select %34, %42, %43 : vector<16x128xi1>, vector<16x128xf32>
    %45 = arith.mulf %32, %16 : vector<16x128xf32>
    %cst_18 = arith.constant -7.500000e-01 : f32
    %46 = vector.broadcast %cst_18 : f32 to vector<16x128xf32>
    %47 = arith.mulf %46, %45 : vector<16x128xf32>
    %cst_19 = arith.constant 0.000000e+00 : f32
    %48 = vector.broadcast %cst_19 : f32 to vector<16x128xf32>
    %49 = arith.select %39, %47, %48 : vector<16x128xi1>, vector<16x128xf32>
    %50 = arith.addf %44, %49 : vector<16x128xf32>
    %c0_20 = arith.constant 0 : index
    %c0_21 = arith.constant 0 : index
    %51 = vector.load %arg7[%c0_20, %c0_21] : memref<8x128xf32, #tpu.memory_space<vmem>>, vector<8x128xf32>
    %52 = vector.shape_cast %50 : vector<16x128xf32> to vector<2x8x128xf32>
    %cst_22 = arith.constant dense<0.000000e+00> : vector<8x128xf32>
    %53 = vector.multi_reduction <add>, %52, %cst_22 [0] : vector<2x8x128xf32> to vector<8x128xf32>
    %54 = arith.addf %51, %53 : vector<8x128xf32>
    %c0_23 = arith.constant 0 : index
    %c0_24 = arith.constant 0 : index
    %55 = vector.load %arg7[%c0_23, %c0_24] : memref<8x128xf32, #tpu.memory_space<vmem>>, vector<8x128xf32>
    tpu.vector_store %arg7[%c0_23, %c0_24], %54 {strides = array<i32>} : memref<8x128xf32, #tpu.memory_space<vmem>>, vector<8x128xf32>,
    %c0_i32_25 = arith.constant 0 : i32
    %56 = arith.cmpi eq, %arg1, %c0_i32_25 : i32
    %57 = arith.extui %56 : i1 to i32
    %c0_i32_26 = arith.constant 0 : i32
    %58 = arith.cmpi ne, %57, %c0_i32_26 : i32
    scf.if %58 {
      %c0_27 = arith.constant 0 : index
      %c0_28 = arith.constant 0 : index
      %59 = vector.load %arg7[%c0_27, %c0_28] : memref<8x128xf32, #tpu.memory_space<vmem>>, vector<8x128xf32>
      %60 = vector.shape_cast %59 : vector<8x128xf32> to vector<1x8x128xf32>
      %cst_29 = arith.constant dense<0.000000e+00> : vector<1xf32>
      %61 = vector.multi_reduction <add>, %60, %cst_29 [1, 2] : vector<1x8x128xf32> to vector<1xf32>
      %62 = vector.shape_cast %61 : vector<1xf32> to vector<1x1x1xf32>
      %63 = vector.extract %62[0, 0, 0] : f32 from vector<1x1x1xf32>
      %64 = vector.broadcast %63 : f32 to vector<1x128xf32>
      %c0_30 = arith.constant 0 : index
      %c0_31 = arith.constant 0 : index
      %65 = vector.load %arg6[%c0_30, %c0_31] : memref<1x128xf32, #tpu.memory_space<vmem>>, vector<1x128xf32>
      tpu.vector_store %arg6[%c0_30, %c0_31], %64 {strides = array<i32>} : memref<1x128xf32, #tpu.memory_space<vmem>>, vector<1x128xf32>,
    } else {
    }
    return
  }
  func.func @transform_0(%arg0: i32, %arg1: i32) -> (i32, i32) {
    %c1_i32 = arith.constant 1 : i32
    %0 = arith.muli %arg0, %c1_i32 : i32
    %1 = arith.addi %0, %arg1 : i32
    %c0_i32 = arith.constant 0 : i32
    %c0_i32_0 = arith.constant 0 : i32
    return %1, %c0_i32 : i32, i32
  }
  func.func @transform_1(%arg0: i32, %arg1: i32) -> (i32, i32) {
    %c1_i32 = arith.constant 1 : i32
    %0 = arith.muli %arg0, %c1_i32 : i32
    %1 = arith.addi %0, %arg1 : i32
    %c0_i32 = arith.constant 0 : i32
    %c0_i32_0 = arith.constant 0 : i32
    return %1, %c0_i32 : i32, i32
  }
  func.func @transform_2(%arg0: i32, %arg1: i32) -> (i32, i32) {
    %c0_i32 = arith.constant 0 : i32
    %c0_i32_0 = arith.constant 0 : i32
    %c0_i32_1 = arith.constant 0 : i32
    return %c0_i32, %c0_i32_0 : i32, i32
  }
  func.func @transform_3(%arg0: i32, %arg1: i32) -> (i32, i32) {
    %c0_i32 = arith.constant 0 : i32
    %c0_i32_0 = arith.constant 0 : i32
    %c0_i32_1 = arith.constant 0 : i32
    return %c0_i32, %c0_i32_0 : i32, i32
  }
  func.func @transform_4(%arg0: i32, %arg1: i32) -> (i32, i32) {
    %c0_i32 = arith.constant 0 : i32
    %c0_i32_0 = arith.constant 0 : i32
    return %c0_i32, %arg0 : i32, i32
  }
}

</mosaic_0001>

<llo_original>
// kernel: sigmoid_focal_loss.1
$region0: #{sigmoid_focal_loss.1}
  #allocation0 [shape = 'u32[]', space=smem, size = 0x4, offset = 0x4, fixed_abs, tag = 'smem constant byte address 0x4 - core index']
  #allocation1 [shape = 'u32[144,128]{1,0:T(1,128)}', space=vmem, size = 0x12000, scoped, tag = 'internal scratch']
  #allocation2 [shape = 'f32[8,128]{1,0:T(8,128)}', space=vmem, size = 0x1000, scoped, tag = 'scratch operand']
  %s0 = inlined_call_operand.vmem [shape: f32[32,128], index: 0, kind: input, shape index: {}]
  %s1 = inlined_call_operand.vmem [shape: f32[32,16], index: 1, kind: input, shape index: {}]
  %s2 = inlined_call_operand.vmem [shape: f32[16,128], index: 2, kind: input, shape index: {}]
  %s3 = inlined_call_operand.vmem [shape: f32[1,128], index: 3, kind: input, shape index: {}]
  %s4 = inlined_call_operand.vmem [shape: f32[1,256], index: 4, kind: output, shape index: {}]
  %s5 = sld [smem:[#allocation0]]
  $region57: #{sigmoid_focal_loss.1} parent=0
    _
  %s7 = ssub.s32 1, %s5
  %s8 = scalar_select 0, %s7, %s5
  loop: start=0, step=1, limit=4
  $region2: #{sigmoid_focal_loss.1} parent=0 // loop_pre_header
    _
  $region3: #{sigmoid_focal_loss.1} parent=0 // loop_header
    %s10 = sphi 0, %s14
    %p11 = scmp.ge.s32.totalorder %s10, 4
    %s17 = sphi 0, %s29
    %s18 = sphi 0, %s25
    %s19 = sphi 0, %s17
    %s20 = sphi 0, %s18
    %s21 = sphi 0, %s19
    %s22 = sphi 0, %s20
    %s34 = sphi 0, %s36
    %s37 = sphi 0, %s34
    %s38 = sphi 0, %s37
    %s54 = sphi 0, %s38
    %s62 = sphi 0, %s64
    %s65 = sphi 0, %s62
    %s66 = sphi 0, %s65
    %s82 = sphi 0, %s66
    %s86 = sphi 0, %s86
    %s88 = sphi 0, %s86
    %s89 = sphi 0, %s88
    %s103 = sphi 0, %s89
    %s107 = sphi 0, %s107
    %s109 = sphi 0, %s107
    %s110 = sphi 0, %s109
    %s124 = sphi 0, %s110
    %s130 = sphi 0, %s132
    %s133 = sphi 0, %s130
    %s134 = sphi 0, %s133
    %s150 = sphi 0, %s134
  $region4: #{sigmoid_focal_loss.1} parent=0 // loop_header_branch
    %13 = sbr.rel (%p11) target = $region8
  $region5: #{sigmoid_focal_loss.1} parent=0 // loop_body
    %s15 = ssub.s32 %s10, 1
    %s16 = ssub.s32 %s10, 2
    %s23 = sadd.s32 1, %s18
    %p24 = scmp.ge.s32.totalorder %s23, 1
    %s25 = scalar_select %p24, 0, %s23
    %s26 = sadd.s32 1, %s17
    %s27 = scalar_select %p24, %s26, %s17
    %p28 = scmp.ge.s32.totalorder %s27, 2
    %s29 = scalar_select %p28, 0, %s27
    %s30 = sadd.s32 %s17, %s18
    %s31 = sadd.s32 %s29, %s25
    %s32 = ssub.s32 %s30, %s31
    %p33 = scmp.eq.s32.totalorder %s32, 0
    %s35 = sadd.s32 %s34, 1
    %s36 = scalar_select %p33, %s34, %s35
    %p39 = pneg %p33
    %p40 = scmp.eq.s32.totalorder %s10, 1
    %p41 = por %p39, %p40
    %p42 = scmp.ne.s32.totalorder %s34, %s37
    %p43 = scmp.eq.s32.totalorder %s10, 0
    %p44 = por %p42, %p43
    %p45 = scmp.ne.s32.totalorder %s34, %s37
    %p46 = scmp.eq.s32.totalorder %s15, 1
    %p47 = por %p45, %p46
    %p48 = scmp.ne.s32.totalorder %s37, %s38
    %p49 = scmp.eq.s32.totalorder %s15, 0
    %p50 = por %p48, %p49
    %p51 = scmp.ne.s32.totalorder %s37, %s38
    %p52 = scmp.eq.s32.totalorder %s16, 1
    %p53 = por %p51, %p52
    %p55 = scmp.ne.s32.totalorder %s38, %s54
    %p56 = scmp.eq.s32.totalorder %s16, 0
    %p57 = por %p55, %p56
    %s58 = sadd.s32 %s17, %s18
    %s59 = sadd.s32 %s29, %s25
    %s60 = ssub.s32 %s58, %s59
    %p61 = scmp.eq.s32.totalorder %s60, 0
    %s63 = sadd.s32 %s62, 1
    %s64 = scalar_select %p61, %s62, %s63
    %p67 = pneg %p61
    %p68 = scmp.eq.s32.totalorder %s10, 1
    %p69 = por %p67, %p68
    %p70 = scmp.ne.s32.totalorder %s62, %s65
    %p71 = scmp.eq.s32.totalorder %s10, 0
    %p72 = por %p70, %p71
    %p73 = scmp.ne.s32.totalorder %s62, %s65
    %p74 = scmp.eq.s32.totalorder %s15, 1
    %p75 = por %p73, %p74
    %p76 = scmp.ne.s32.totalorder %s65, %s66
    %p77 = scmp.eq.s32.totalorder %s15, 0
    %p78 = por %p76, %p77
    %p79 = scmp.ne.s32.totalorder %s65, %s66
    %p80 = scmp.eq.s32.totalorder %s16, 1
    %p81 = por %p79, %p80
    %p83 = scmp.ne.s32.totalorder %s66, %s82
    %p84 = scmp.eq.s32.totalorder %s16, 0
    %p85 = por %p83, %p84
    %s87 = sadd.s32 %s86, 1
    %p90 = scmp.eq.s32.totalorder %s10, 1
    %p91 = scmp.ne.s32.totalorder %s86, %s88
    %p92 = scmp.eq.s32.totalorder %s10, 0
    %p93 = por %p91, %p92
    %p94 = scmp.ne.s32.totalorder %s86, %s88
    %p95 = scmp.eq.s32.totalorder %s15, 1
    %p96 = por %p94, %p95
    %p97 = scmp.ne.s32.totalorder %s88, %s89
    %p98 = scmp.eq.s32.totalorder %s15, 0
    %p99 = por %p97, %p98
    %p100 = scmp.ne.s32.totalorder %s88, %s89
    %p101 = scmp.eq.s32.totalorder %s16, 1
    %p102 = por %p100, %p101
    %p104 = scmp.ne.s32.totalorder %s89, %s103
    %p105 = scmp.eq.s32.totalorder %s16, 0
    %p106 = por %p104, %p105
    %s108 = sadd.s32 %s107, 1
    %p111 = scmp.eq.s32.totalorder %s10, 1
    %p112 = scmp.ne.s32.totalorder %s107, %s109
    %p113 = scmp.eq.s32.totalorder %s10, 0
    %p114 = por %p112, %p113
    %p115 = scmp.ne.s32.totalorder %s107, %s109
    %p116 = scmp.eq.s32.totalorder %s15, 1
    %p117 = por %p115, %p116
    %p118 = scmp.ne.s32.totalorder %s109, %s110
    %p119 = scmp.eq.s32.totalorder %s15, 0
    %p120 = por %p118, %p119
    %p121 = scmp.ne.s32.totalorder %s109, %s110
    %p122 = scmp.eq.s32.totalorder %s16, 1
    %p123 = por %p121, %p122
    %p125 = scmp.ne.s32.totalorder %s110, %s124
    %p126 = scmp.eq.s32.totalorder %s16, 0
    %p127 = por %p125, %p126
    %s128 = ssub.s32 %s17, %s29
    %p129 = scmp.eq.s32.totalorder %s128, 0
    %s131 = sadd.s32 %s130, 1
    %s132 = scalar_select %p129, %s130, %s131
    %p135 = pneg %p129
    %p136 = scmp.eq.s32.totalorder %s10, 1
    %p137 = por %p135, %p136
    %p138 = scmp.ne.s32.totalorder %s130, %s133
    %p139 = scmp.eq.s32.totalorder %s10, 0
    %p140 = por %p138, %p139
    %p141 = scmp.ne.s32.totalorder %s130, %s133
    %p142 = scmp.eq.s32.totalorder %s15, 1
    %p143 = por %p141, %p142
    %p144 = scmp.ne.s32.totalorder %s133, %s134
    %p145 = scmp.eq.s32.totalorder %s15, 0
    %p146 = por %p144, %p145
    %p147 = scmp.ne.s32.totalorder %s133, %s134
    %p148 = scmp.eq.s32.totalorder %s16, 1
    %p149 = por %p147, %p148
    %p151 = scmp.ne.s32.totalorder %s134, %s150
    %p152 = scmp.eq.s32.totalorder %s16, 0
    %p153 = por %p151, %p152
    %p154 = scmp.le.s32.totalorder 1, %s10
    %p155 = scmp.lt.s32.totalorder %s10, 3
    %p156 = pnand %p154, %p155
    %p157 = pneg %p156
    // Predicated region
    $region9: #{sigmoid_focal_loss.1} parent=5 // pred_check
      _
    $region10: #{sigmoid_focal_loss.1} parent=5 // pred_check_branch
      %159 = sbr.rel (%p156) target = $region12
    $region11: #{sigmoid_focal_loss.1} parent=5 // pred_region
      %s160 = ssub.s32 %s10, 1
      // Predicated region
      $region13: #{sigmoid_focal_loss.1} parent=11 // pred_check
        %p161 = pneg %p99
      $region14: #{sigmoid_focal_loss.1} parent=11 // pred_check_branch
        %163 = sbr.rel (%p161) target = $region16
      $region15: #{sigmoid_focal_loss.1} parent=11 // pred_region
        _
      $region16: #{sigmoid_focal_loss.1} parent=11 // pred_fallthru
        _
      // Predicated region
      $region17: #{sigmoid_focal_loss.1} parent=11 // pred_check
        %p164 = pneg %p120
      $region18: #{sigmoid_focal_loss.1} parent=11 // pred_check_branch
        %166 = sbr.rel (%p164) target = $region20
      $region19: #{sigmoid_focal_loss.1} parent=11 // pred_region
        _
      $region20: #{sigmoid_focal_loss.1} parent=11 // pred_fallthru
        _
    $region12: #{sigmoid_focal_loss.1} parent=5 // pred_fallthru
      _
    %p167 = scmp.lt.s32.totalorder %s10, 2
    // Predicated region
    $region21: #{sigmoid_focal_loss.1} parent=5 // pred_check
      %p168 = pneg %p167
    $region22: #{sigmoid_focal_loss.1} parent=5 // pred_check_branch
      %170 = sbr.rel (%p168) target = $region24
    $region23: #{sigmoid_focal_loss.1} parent=5 // pred_region
      // Predicated region
      $region25: #{sigmoid_focal_loss.1} parent=23 // pred_check
        %p171 = pneg %p44
      $region26: #{sigmoid_focal_loss.1} parent=23 // pred_check_branch
        %173 = sbr.rel (%p171) target = $region28
      $region27: #{sigmoid_focal_loss.1} parent=23 // pred_region
        %s174 = sadd.s32 %s17, %s18
        %s175 = smul.u32 2, %s174
        %p176 = scmp.lt.s32.totalorder %s175, 3
        %s177 = scalar_select %p176, %s175, 3
        %s178 = smul.addr %s177, 8
        %s179 = scalar_lea.vmem %s0, %s178
        %s180 = sadd.s32 %s17, %s18
        %s181 = smul.u32 2, %s180
      $region28: #{sigmoid_focal_loss.1} parent=23 // pred_fallthru
        _
      // Predicated region
      $region29: #{sigmoid_focal_loss.1} parent=23 // pred_check
        %p182 = pneg %p72
      $region30: #{sigmoid_focal_loss.1} parent=23 // pred_check_branch
        %184 = sbr.rel (%p182) target = $region32
      $region31: #{sigmoid_focal_loss.1} parent=23 // pred_region
        %s185 = sadd.s32 %s17, %s18
        %s186 = smul.u32 2, %s185
        %p187 = scmp.lt.s32.totalorder %s186, 3
        %s188 = scalar_select %p187, %s186, 3
        %s189 = smul.addr %s188, 8
        %s190 = scalar_lea.vmem %s1, %s189
        %s191 = sadd.s32 %s17, %s18
        %s192 = smul.u32 2, %s191
      $region32: #{sigmoid_focal_loss.1} parent=23 // pred_fallthru
        _
    $region24: #{sigmoid_focal_loss.1} parent=5 // pred_fallthru
      _
    %p193 = scmp.le.s32.totalorder 1, %s10
    %p194 = scmp.lt.s32.totalorder %s10, 3
    %p195 = pnand %p193, %p194
    %p196 = pneg %p195
    // Predicated region
    $region33: #{sigmoid_focal_loss.1} parent=5 // pred_check
      _
    $region34: #{sigmoid_focal_loss.1} parent=5 // pred_check_branch
      %198 = sbr.rel (%p195) target = $region36
    $region35: #{sigmoid_focal_loss.1} parent=5 // pred_region
      %s199 = ssub.s32 %s10, 1
      %s200 = sadd.s32 %s19, %s20
      %s201 = smul.u32 2, %s200
      %p202 = scmp.lt.s32.totalorder %s201, 3
      %s203 = scalar_select %p202, %s201, 3
      %s204 = smul.addr %s203, 8
      %s205 = scalar_lea.vmem %s0, %s204
      %p206 = pneg %p50
      %p207 = pneg %p47
      %s208 = sadd.s32 %s19, %s20
      %s209 = smul.u32 2, %s208
      %p210 = scmp.lt.s32.totalorder %s209, 3
      %s211 = scalar_select %p210, %s209, 3
      %s212 = smul.addr %s211, 8
      %s213 = scalar_lea.vmem %s1, %s212
      %p214 = pneg %p78
      %p215 = pneg %p75
      %p216 = pneg %p99
      %p217 = pneg %p96
      %p218 = pneg %p120
      %p219 = pneg %p117
      %p220 = pneg %p146
      %p221 = pneg %p143
      %p222 = scmp.lt.s32.totalorder %s19, 1
      %s223 = scalar_select %p222, %s19, 1
      %s224 = scalar_lea.vmem %s4, %s223
      %s225 = sadd.s32 %s19, %s20
      %s226 = smul.u32 2, %s225
      %p227 = scmp.lt.s32.totalorder %s226, 3
      %s228 = scalar_select %p227, %s226, 3
      %s229 = smul.addr %s228, 8
      %s230 = scalar_lea.vmem %s0, %s229
      %s231 = sadd.s32 %s19, %s20
      %s232 = smul.u32 2, %s231
      %s233 = sadd.s32 %s19, %s20
      %s234 = smul.u32 2, %s233
      %p235 = scmp.lt.s32.totalorder %s234, 3
      %s236 = scalar_select %p235, %s234, 3
      %s237 = smul.addr %s236, 8
      %s238 = scalar_lea.vmem %s1, %s237
      %s239 = sadd.s32 %s19, %s20
      %s240 = smul.u32 2, %s239
      %p241 = scmp.lt.s32.totalorder %s19, 1
      %s242 = scalar_select %p241, %s19, 1
      %s243 = scalar_lea.vmem %s4, %s242
      %p244 = scmp.eq.s32.totalorder %s20, 0
      // Predicated region
      $region37: #{sigmoid_focal_loss.1} parent=35 // pred_check
        %p245 = pneg %p244
      $region38: #{sigmoid_focal_loss.1} parent=35 // pred_check_branch
        %247 = sbr.rel (%p245) target = $region40
      $region39: #{sigmoid_focal_loss.1} parent=35 // pred_region
        %248 = vst [vmem:[#allocation2] sm:$0xff] 0.0
      $region40: #{sigmoid_focal_loss.1} parent=35 // pred_fallthru
        _
      %v249 = vld [vmem:[%s230] sm:$0xff]
      %v250 = vld [vmem:[%s230 + $0x8] sm:$0xff]
      %v251 = vld [vmem:[%s3] sm:$0x1]
      %v252 = vld [vmem:[%s238] sm:$0xff]
      %v253 = vld [vmem:[%s238 + $0x8] sm:$0xff]
      %v254 = vld [vmem:[%s2] sm:$0xff]
      %v255 = vld [vmem:[%s2 + $0x8] sm:$0xff]
      %vm256 = vcmask 130048
      %v258 = vsel %vm256, %v252, 0
      %v261 = vsel %vm256, %v253, 0
      %263 = vmatprep.subr.mxu0 0.0
      %264 = vmatpush1.msra.mxu0 0.0
      %265 = vmatprep.subr.mxu0 0.0
      %266 = vmatpush1.msra.mxu0 0.0
      %267 = vmatprep.subr.mxu0 0.0
      %268 = vmatpush1.msra.mxu0 0.0
      %269 = vmatprep.subr.mxu0 0.0
      %270 = vmatpush1.msra.mxu0 0.0
      %271 = vmatprep.subr.mxu0 0.0
      %272 = vmatpush1.msra.mxu0 0.0
      %273 = vmatprep.subr.mxu0 0.0
      %274 = vmatpush1.msra.mxu0 0.0
      %275 = vmatprep.subr.mxu0 0.0
      %276 = vmatpush1.msra.mxu0 0.0
      %277 = vmatprep.subr.mxu0 0.0
      %278 = vmatpush1.msra.mxu0 0.0
      %279 = vmatprep.subr.mxu0 0.0
      %280 = vmatpush1.msra.mxu0 0.0
      %281 = vmatprep.subr.mxu0 0.0
      %282 = vmatpush1.msra.mxu0 0.0
      %283 = vmatprep.subr.mxu0 0.0
      %284 = vmatpush1.msra.mxu0 0.0
      %285 = vmatprep.subr.mxu0 0.0
      %286 = vmatpush1.msra.mxu0 0.0
      %287 = vmatprep.subr.mxu0 0.0
      %288 = vmatpush1.msra.mxu0 0.0
      %289 = vmatprep.subr.mxu0 0.0
      %290 = vmatpush1.msra.mxu0 0.0
      %291 = vmatprep.subr.mxu0 0.0
      %292 = vmatpush1.msra.mxu0 %v255
      %293 = vmatprep.subr.mxu0 0.0
      %294 = vmatpush1.msra.mxu0 %v254
      %295 = vmatprep.subr.mxu0 0.0
      %296 = vmatpush2.msra.mxu0 0.0
      %297 = vmatprep.subr.mxu0 0.0
      %298 = vmatpush2.msra.mxu0 0.0
      %299 = vmatprep.subr.mxu0 0.0
      %300 = vmatpush2.msra.mxu0 0.0
      %301 = vmatprep.subr.mxu0 0.0
      %302 = vmatpush2.msra.mxu0 0.0
      %303 = vmatprep.subr.mxu0 0.0
      %304 = vmatpush2.msra.mxu0 0.0
      %305 = vmatprep.subr.mxu0 0.0
      %306 = vmatpush2.msra.mxu0 0.0
      %307 = vmatprep.subr.mxu0 0.0
      %308 = vmatpush2.msra.mxu0 0.0
      %309 = vmatprep.subr.mxu0 0.0
      %310 = vmatpush2.msra.mxu0 0.0
      %311 = vmatprep.subr.mxu0 0.0
      %312 = vmatpush2.msra.mxu0 0.0
      %313 = vmatprep.subr.mxu0 0.0
      %314 = vmatpush2.msra.mxu0 0.0
      %315 = vmatprep.subr.mxu0 0.0
      %316 = vmatpush2.msra.mxu0 0.0
      %317 = vmatprep.subr.mxu0 0.0
      %318 = vmatpush2.msra.mxu0 0.0
      %319 = vmatprep.subr.mxu0 0.0
      %320 = vmatpush2.msra.mxu0 0.0
      %321 = vmatprep.subr.mxu0 0.0
      %322 = vmatpush2.msra.mxu0 0.0
      %323 = vmatprep.subr.mxu0 0.0
      %324 = vmatpush2.msra.mxu0 0.0
      %325 = vmatprep.subr.mxu0 0.0
      %326 = vmatpush2.msra.mxu0 0.0
      %327 = vmatprep.mubr.f32.mxu0 0.0
      %328 = vmatmul.mubr.f32.gmra.mxu0 %v258
      %v329 = vpop.f32.mrf.mxu0
      %v330 = vadd.f32 0.0, %v329
      %v331 = vpop.f32.mrf.mxu0
      %332 = vmatprep.mubr.f32.mxu0 0.0
      %333 = vmatmul.mubr.f32.gmra.mxu0 %v261
      %v334 = vpop.f32.mrf.mxu0
      %v335 = vadd.f32 0.0, %v334
      %v336 = vpop.f32.mrf.mxu0
      %337 = vdwg.mxu0
      %v338 = vand.u32 2147483647, %v249
      %v339 = vand.u32 2147483647, %v250
      %v340 = vsub.f32 0.0, %v338
      %v341 = vsub.f32 0.0, %v339
      %v342 = vmul.f32 %v340, 1.442695
      %v343 = vpow.pop %v342
      %v344 = vmul.f32 %v341, 1.442695
      %v345 = vpow.pop %v344
      %v346 = vmin.f32 %v249, 0.0
      %v347 = vmin.f32 %v250, 0.0
      %v348 = vadd.f32 %v343, 1.0
      %v349 = vlog2.pop %v348
      %v350 = vmul.f32 %v349, 0.6931472
      %v351 = vmul.f32 -0.5, %v343
      %v352 = vadd.f32 %v351, 1.0
      %v353 = vmul.f32 %v352, %v343
      %v354 = vand.u32 2147483647, %v343
      %vm355 = vcmp.lt.f32.partialorder %v354, 0.0004427343
      %v356 = vsel %vm355, %v353, %v350
      %v357 = vadd.f32 %v345, 1.0
      %v358 = vlog2.pop %v357
      %v359 = vmul.f32 %v358, 0.6931472
      %v360 = vmul.f32 -0.5, %v345
      %v361 = vadd.f32 %v360, 1.0
      %v362 = vmul.f32 %v361, %v345
      %v363 = vand.u32 2147483647, %v345
      %vm364 = vcmp.lt.f32.partialorder %v363, 0.0004427343
      %v365 = vsel %vm364, %v362, %v359
      %v366 = vsub.f32 %v346, %v356
      %v367 = vsub.f32 %v347, %v365
      %v368 = vsub.f32 %v366, %v249
      %v369 = vsub.f32 %v367, %v250
      %v370 = vadd.f32 %v343, 1.0
      %v371 = vadd.f32 %v345, 1.0
      %v372 = vrcp.pop %v370
      %v373 = vrcp.pop %v371
      %v374 = vmul.f32 %v370, %v372
      %v375 = vmul.f32 %v371, %v373
      %v376 = vsub.f32 2.0, %v374
      %v377 = vsub.f32 2.0, %v375
      %v378 = vmul.f32 %v372, %v376
      %v379 = vmul.f32 %v373, %v377
      %vm380 = vcmp.ge.f32.partialorder %v249, 0.0
      %vm381 = vcmp.ge.f32.partialorder %v250, 0.0
      %v382 = vsel %vm380, 1.0, %v343
      %v383 = vsel %vm381, 1.0, %v345
      %v384 = vmul.f32 %v382, %v378
      %v385 = vmul.f32 %v383, %v379
      %v386 = vsub.f32 1.0, %v384
      %v387 = vsub.f32 1.0, %v385
      %v388 = vmul.f32 %v386, %v386
      %v389 = vmul.f32 %v387, %v387
      %v390 = vmul.f32 %v384, %v384
      %v391 = vmul.f32 %v385, %v385
      %v393 = vlaneseq
      %v394 = vshrl.u32 %v393, 7
      %v395 = vsub.s32 0, %v394
      %v396 = vrot.slane %v251, %v395
      %vm398 = vcmp.eq.f32.partialorder %v330, %v396
      %vm399 = vcmp.eq.f32.partialorder %v335, %v396
      %vm400 = vcmp.ne.f32.partialorder %v330, %v396
      %vm401 = vcmp.ne.f32.partialorder %v335, %v396
      %vm402 = vcmp.ge.f32.partialorder %v330, 0.0
      %vm403 = vcmp.ge.f32.partialorder %v335, 0.0
      %vm404 = vmand %vm400, %vm402
      %vm405 = vmand %vm401, %vm403
      %v406 = vmul.f32 %v388, %v366
      %v407 = vmul.f32 %v389, %v367
      %v408 = vmul.f32 %v406, -0.25
      %v409 = vmul.f32 %v407, -0.25
      %v410 = vsel %vm398, %v408, 0.0
      %v411 = vsel %vm399, %v409, 0.0
      %v412 = vmul.f32 %v390, %v368
      %v413 = vmul.f32 %v391, %v369
      %v414 = vmul.f32 %v412, -0.75
      %v415 = vmul.f32 %v413, -0.75
      %v416 = vsel %vm404, %v414, 0.0
      %v417 = vsel %vm405, %v415, 0.0
      %v418 = vadd.f32 %v410, %v416
      %v419 = vadd.f32 %v411, %v417
      %v420 = vld [vmem:[#allocation2] sm:$0xff]
      %v421 = vadd.f32 %v418, %v419
      %v422 = vadd.f32 %v420, %v421
      %423 = vst [vmem:[#allocation2] sm:$0xff] %v422
      // Predicated region
      $region41: #{sigmoid_focal_loss.1} parent=35 // pred_check
        %p424 = pneg %p244
      $region42: #{sigmoid_focal_loss.1} parent=35 // pred_check_branch
        %426 = sbr.rel (%p424) target = $region44
      $region43: #{sigmoid_focal_loss.1} parent=35 // pred_region
        %v427 = vld [vmem:[#allocation2] sm:$0xff]
        %428 = vadd.xlane.f32.xlu0 %v427
        %v429 = vpop.xlane.xlu0 %428
        %v430 = vrot.slane %v429, 4
        %v431 = vadd.f32 %v429, %v430
        %v432 = vrot.slane %v431, 2
        %v433 = vadd.f32 %v431, %v432
        %v434 = vrot.slane %v433, 1
        %v435 = vadd.f32 %v433, %v434
        %s436 = vtos %v435
        %v437 = vstv %s436
        %438 = vst [vmem:[%s243] sm:$0x1] %v437
      $region44: #{sigmoid_focal_loss.1} parent=35 // pred_fallthru
        _
      %p439 = scmp.lt.s32.totalorder %s19, 1
      %s440 = scalar_select %p439, %s19, 1
      %s441 = scalar_lea.vmem %s4, %s440
      // Predicated region
      $region45: #{sigmoid_focal_loss.1} parent=35 // pred_check
        %p442 = pneg %p143
      $region46: #{sigmoid_focal_loss.1} parent=35 // pred_check_branch
        %444 = sbr.rel (%p442) target = $region48
      $region47: #{sigmoid_focal_loss.1} parent=35 // pred_region
        _
      $region48: #{sigmoid_focal_loss.1} parent=35 // pred_fallthru
        _
    $region36: #{sigmoid_focal_loss.1} parent=5 // pred_fallthru
      _
    %p445 = scmp.le.s32.totalorder 2, %s10
    // Predicated region
    $region49: #{sigmoid_focal_loss.1} parent=5 // pred_check
      %p446 = pneg %p445
    $region50: #{sigmoid_focal_loss.1} parent=5 // pred_check_branch
      %448 = sbr.rel (%p446) target = $region52
    $region51: #{sigmoid_focal_loss.1} parent=5 // pred_region
      %s449 = ssub.s32 %s10, 2
      // Predicated region
      $region53: #{sigmoid_focal_loss.1} parent=51 // pred_check
        %p450 = pneg %p149
      $region54: #{sigmoid_focal_loss.1} parent=51 // pred_check_branch
        %452 = sbr.rel (%p450) target = $region56
      $region55: #{sigmoid_focal_loss.1} parent=51 // pred_region
        %p453 = scmp.lt.s32.totalorder %s21, 1
        %s454 = scalar_select %p453, %s21, 1
        %s455 = scalar_lea.vmem %s4, %s454
      $region56: #{sigmoid_focal_loss.1} parent=51 // pred_fallthru
        _
    $region52: #{sigmoid_focal_loss.1} parent=5 // pred_fallthru
      _
  $region6: #{sigmoid_focal_loss.1} parent=0 // loop_footer
    %s14 = sadd.s32 1, %s10
  $region7: #{sigmoid_focal_loss.1} parent=0 // loop_footer_branch
    %9 = sbr.rel target = $region3
  $region8: #{sigmoid_focal_loss.1} parent=0 // loop_exit
    _

</llo_original>
